<compile_context>
chip_gen: v7x
topology: tpu7x:2x2x1
jax: 0.10.0
libtpu: 0.0.40
codegen_flags: <defaults>
</compile_context>

<pallas_src>
import numpy as np
import jax
import jax.numpy as jnp
from jax.experimental import pallas as pl
from jax.experimental.pallas import tpu as pltpu


def make_fsq_forward(levels, eps=1e-3, row_tile=1024, lane_width=512):
    """Builds an FSQ forward fn (matching FSQ.forward) for a fixed `levels`."""
    assert row_tile % 8 == 0, "row_tile must be a multiple of 8 (sublanes)"
    levels_np = np.asarray(levels)
    D = len(levels)

    # Per-dimension constants (float64 once, then cast to f32).
    half_l = (levels_np - 1).astype(np.float64) * (1.0 - eps) / 2.0
    offset = np.where(levels_np % 2 == 1, 0.0, 0.5)
    shift = np.tan(offset / half_l)
    inv_half_width = 1.0 / (levels_np // 2).astype(np.float64)

    # Lane-dense width: a multiple of 128 that D divides (D=4 -> C=512).
    base = int(np.lcm(D, 128))
    C = base * max(1, lane_width // base)
    reps = C // D

    def tile_c(v):
        return jnp.asarray(np.tile(v, reps).astype(np.float32).reshape(1, C))

    shift_c, half_l_c, offset_c, inv_hw_c = map(
        tile_c, (shift, half_l, offset, inv_half_width))

    # (D,)-shaped constants for the small plain-JAX tail path.
    shift_d = jnp.asarray(shift.astype(np.float32))
    half_l_d = jnp.asarray(half_l.astype(np.float32))
    offset_d = jnp.asarray(offset.astype(np.float32))
    inv_hw_d = jnp.asarray(inv_half_width.astype(np.float32))

    def fsq_kernel(shift_ref, half_l_ref, offset_ref, inv_hw_ref, x_ref, o_ref):
        z = x_ref[...].astype(jnp.float32)                       # (tile_r, C)
        # bound(z) = tanh(z + shift) * half_l - offset
        bounded = jnp.tanh(z + shift_ref[...]) * half_l_ref[...] - offset_ref[...]
        # round_ste forward is just round(); quantize = zhat / half_width
        zhat = jnp.round(bounded)
        o_ref[...] = (zhat * inv_hw_ref[...]).astype(o_ref.dtype)

    def run_kernel(x2):                                          # x2: (R, C), native dtype
        R = x2.shape[0]
        tile_r = min(row_tile, R)
        grid = (pl.cdiv(R, tile_r),)
        const_spec = pl.BlockSpec((1, C), lambda i: (0, 0))      # same block every step
        data_spec = pl.BlockSpec((tile_r, C), lambda i: (i, 0))
        return pl.pallas_call(
            fsq_kernel,
            out_shape=jax.ShapeDtypeStruct((R, C), jnp.float32),
            grid_spec=pl.GridSpec(
                grid=grid,
                in_specs=[const_spec, const_spec, const_spec, const_spec, data_spec],
                out_specs=data_spec,
            ),
            compiler_params=pltpu.CompilerParams(
                dimension_semantics=("parallel",)),
        )(shift_c, half_l_c, offset_c, inv_hw_c, x2)

    def fsq_tail(z_flat):
        # Plain-JAX path for the < C leftover elements (always a multiple of D).
        z = z_flat.reshape(-1, D).astype(jnp.float32)
        bounded = jnp.tanh(z + shift_d) * half_l_d - offset_d
        return (jnp.round(bounded) * inv_hw_d).reshape(-1)

    def fsq_forward(x):
        assert x.shape[-1] == D, f"last dim must be {D}, got {x.shape[-1]}"
        orig_shape = x.shape
        n_total = int(np.prod(orig_shape))
        x_flat = x.reshape(-1)

        n_bulk_rows = n_total // C
        n_bulk = n_bulk_rows * C

        if n_bulk_rows == 0:
            out_flat = fsq_tail(x_flat)
        else:
            bulk_out = run_kernel(x_flat[:n_bulk].reshape(n_bulk_rows, C)).reshape(-1)
            if n_bulk == n_total:
                out_flat = bulk_out
            else:
                out_flat = jnp.concatenate([bulk_out, fsq_tail(x_flat[n_bulk:])])
        return out_flat.reshape(orig_shape)

    return fsq_forward


def fsq_reference(x, levels, eps=1e-3):
    """Pure-JAX reference matching the PyTorch forward (.float() output)."""
    levels_np = np.asarray(levels)
    half_l_np = (levels_np - 1).astype(np.float64) * (1.0 - eps) / 2.0
    offset_np = np.where(levels_np % 2 == 1, 0.0, 0.5)
    shift_np = np.tan(offset_np / half_l_np)
    half_l = jnp.asarray(half_l_np.astype(np.float32))
    offset = jnp.asarray(offset_np.astype(np.float32))
    shift = jnp.asarray(shift_np.astype(np.float32))
    half_width = jnp.asarray((levels_np // 2).astype(np.float32))
    z = x.astype(jnp.float32)
    bounded = jnp.tanh(z + shift) * half_l - offset
    return (jnp.round(bounded) / half_width).astype(jnp.float32)


if __name__ == "__main__":
    levels = [8, 5, 5, 5]            # codebook dims -> D = 4
    fsq = make_fsq_forward(levels)

    # 1) Shape whose element count is a multiple of the 512-lane view -> pure kernel path.
    x = jax.random.normal(jax.random.PRNGKey(0), (4, 128, 4), dtype=jnp.float32) * 2.0
    y = jax.block_until_ready(fsq(x))
    np.testing.assert_allclose(np.asarray(y), np.asarray(fsq_reference(x, levels)),
                               atol=1e-5, rtol=1e-5)
    assert y.shape == x.shape and y.dtype == jnp.float32

    # 2) Ragged element count -> bulk kernel + tiny plain-JAX tail.
    x2 = jax.random.normal(jax.random.PRNGKey(1), (3, 200, 4), dtype=jnp.float32) * 2.0
    y2 = jax.block_until_ready(fsq(x2))
    np.testing.assert_allclose(np.asarray(y2), np.asarray(fsq_reference(x2, levels)),
                               atol=1e-5, rtol=1e-5)
    assert y2.shape == x2.shape and y2.dtype == jnp.float32

    # 3) bf16 input: kernel reads bf16 (half HBM traffic), upcasts in-VMEM,
    #    output stays float32 per the module's `.float()`.
    x3 = jax.random.normal(jax.random.PRNGKey(2), (2, 256, 4), dtype=jnp.bfloat16)
    y3 = jax.block_until_ready(fsq(x3))
    np.testing.assert_allclose(np.asarray(y3), np.asarray(fsq_reference(x3, levels)),
                               atol=1e-5, rtol=1e-5)
    assert y3.shape == x3.shape and y3.dtype == jnp.float32

    print("KERNEL_OK")
</pallas_src>

<mosaic_0001>
module attributes {stable_mosaic.version = 11 : i64} {
  func.func @fsq_kernel(%arg0: i32, %arg1: memref<1x512xf32, #tpu.memory_space<vmem>>, %arg2: memref<1x512xf32, #tpu.memory_space<vmem>>, %arg3: memref<1x512xf32, #tpu.memory_space<vmem>>, %arg4: memref<1x512xf32, #tpu.memory_space<vmem>>, %arg5: memref<4x512xf32, #tpu.memory_space<vmem>>, %arg6: memref<4x512xf32, #tpu.memory_space<vmem>>) attributes {dimension_semantics = [#tpu.dimension_semantics<parallel>], iteration_bounds = array<i64: 1>, scalar_prefetch = 0 : i64, scratch_operands = 0 : i64, tpu.core_type = #tpu.core_type<tc>, window_params = [{pipeline_mode = #tpu.pipeline_mode<synchronous>, transform_indices = @transform_0, window_bounds = array<i64: 1, 512>}, {pipeline_mode = #tpu.pipeline_mode<synchronous>, transform_indices = @transform_1, window_bounds = array<i64: 1, 512>}, {pipeline_mode = #tpu.pipeline_mode<synchronous>, transform_indices = @transform_2, window_bounds = array<i64: 1, 512>}, {pipeline_mode = #tpu.pipeline_mode<synchronous>, transform_indices = @transform_3, window_bounds = array<i64: 1, 512>}, {transform_indices = @transform_4, window_bounds = array<i64: 4, 512>}, {transform_indices = @transform_5, window_bounds = array<i64: 4, 512>}]} {
    %c0 = arith.constant 0 : index
    %c0_0 = arith.constant 0 : index
    %0 = vector.load %arg5[%c0, %c0_0] : memref<4x512xf32, #tpu.memory_space<vmem>>, vector<4x512xf32>
    %c0_1 = arith.constant 0 : index
    %c0_2 = arith.constant 0 : index
    %1 = vector.load %arg1[%c0_1, %c0_2] : memref<1x512xf32, #tpu.memory_space<vmem>>, vector<1x512xf32>
    %2 = vector.broadcast %1 : vector<1x512xf32> to vector<4x512xf32>
    %3 = arith.addf %0, %2 : vector<4x512xf32>
    %4 = math.tanh %3 : vector<4x512xf32>
    %c0_3 = arith.constant 0 : index
    %c0_4 = arith.constant 0 : index
    %5 = vector.load %arg2[%c0_3, %c0_4] : memref<1x512xf32, #tpu.memory_space<vmem>>, vector<1x512xf32>
    %6 = vector.broadcast %5 : vector<1x512xf32> to vector<4x512xf32>
    %7 = arith.mulf %4, %6 : vector<4x512xf32>
    %c0_5 = arith.constant 0 : index
    %c0_6 = arith.constant 0 : index
    %8 = vector.load %arg3[%c0_5, %c0_6] : memref<1x512xf32, #tpu.memory_space<vmem>>, vector<1x512xf32>
    %9 = vector.broadcast %8 : vector<1x512xf32> to vector<4x512xf32>
    %10 = arith.subf %7, %9 : vector<4x512xf32>
    %11 = math.roundeven %10 : vector<4x512xf32>
    %c0_7 = arith.constant 0 : index
    %c0_8 = arith.constant 0 : index
    %12 = vector.load %arg4[%c0_7, %c0_8] : memref<1x512xf32, #tpu.memory_space<vmem>>, vector<1x512xf32>
    %13 = vector.broadcast %12 : vector<1x512xf32> to vector<4x512xf32>
    %14 = arith.mulf %11, %13 : vector<4x512xf32>
    %c0_9 = arith.constant 0 : index
    %c0_10 = arith.constant 0 : index
    %15 = vector.load %arg6[%c0_9, %c0_10] : memref<4x512xf32, #tpu.memory_space<vmem>>, vector<4x512xf32>
    tpu.vector_store %arg6[%c0_9, %c0_10], %14 {strides = array<i32>} : memref<4x512xf32, #tpu.memory_space<vmem>>, vector<4x512xf32>,
    return
  }
  func.func @transform_0(%arg0: i32) -> (i32, i32) {
    %c0_i32 = arith.constant 0 : i32
    %c0_i32_0 = arith.constant 0 : i32
    %c0_i32_1 = arith.constant 0 : i32
    return %c0_i32, %c0_i32_0 : i32, i32
  }
  func.func @transform_1(%arg0: i32) -> (i32, i32) {
    %c0_i32 = arith.constant 0 : i32
    %c0_i32_0 = arith.constant 0 : i32
    %c0_i32_1 = arith.constant 0 : i32
    return %c0_i32, %c0_i32_0 : i32, i32
  }
  func.func @transform_2(%arg0: i32) -> (i32, i32) {
    %c0_i32 = arith.constant 0 : i32
    %c0_i32_0 = arith.constant 0 : i32
    %c0_i32_1 = arith.constant 0 : i32
    return %c0_i32, %c0_i32_0 : i32, i32
  }
  func.func @transform_3(%arg0: i32) -> (i32, i32) {
    %c0_i32 = arith.constant 0 : i32
    %c0_i32_0 = arith.constant 0 : i32
    %c0_i32_1 = arith.constant 0 : i32
    return %c0_i32, %c0_i32_0 : i32, i32
  }
  func.func @transform_4(%arg0: i32) -> (i32, i32) {
    %c0_i32 = arith.constant 0 : i32
    %c0_i32_0 = arith.constant 0 : i32
    return %arg0, %c0_i32 : i32, i32
  }
  func.func @transform_5(%arg0: i32) -> (i32, i32) {
    %c0_i32 = arith.constant 0 : i32
    %c0_i32_0 = arith.constant 0 : i32
    return %arg0, %c0_i32 : i32, i32
  }
}

</mosaic_0001>

<llo_original>
// kernel: tpu_custom_call.1
$region0: #{tpu_custom_call.1}
  #allocation0 [shape = 'u32[]', space=smem, size = 0x4, offset = 0x4, fixed_abs, tag = 'smem constant byte address 0x4 - core index']
  #allocation1 [shape = 'u32[144,128]{1,0:T(1,128)}', space=vmem, size = 0x12000, scoped, tag = 'internal scratch']
  %s0 = inlined_call_operand.hbm [shape: f32[1,512], index: 0, kind: input, shape index: {}]
  %s1 = inlined_call_operand.hbm [shape: f32[1,512], index: 1, kind: input, shape index: {}]
  %s2 = inlined_call_operand.vmem [shape: f32[1,512], index: 2, kind: input, shape index: {}]
  %s3 = inlined_call_operand.vmem [shape: f32[1,512], index: 3, kind: input, shape index: {}]
  %s4 = inlined_call_operand.hbm [shape: f32[4,512], index: 4, kind: input, shape index: {}]
  %s5 = inlined_call_operand.hbm [shape: f32[4,512], index: 5, kind: output, shape index: {}]
  %s6 = sld [smem:[#allocation0]]
  $region42: #{tpu_custom_call.1} parent=0
    _
  %s8 = ssub.s32 1, %s6
  %s9 = scalar_select 0, %s8, %s6
  $region1: #{tpu_custom_call.1} parent=0
    #allocation2 [shape = 'u8[2048]{0}', space=vmem, size = 0x800, scoped, tag = 'input window, operand 0, single buffered']
    #allocation3 [shape = 's32[1]{0}', space=sflag, size = 0x4, scoped, tag = 'scoped memory for tpu_custom_call.1']
    #allocation4 [shape = 's32[1]{0}', space=sflag, size = 0x4, scoped, tag = 'scoped memory for tpu_custom_call.1']
    #allocation5 [shape = 'u8[2048]{0}', space=vmem, size = 0x800, scoped, tag = 'input window, operand 1, single buffered']
    #allocation6 [shape = 's32[1]{0}', space=sflag, size = 0x4, scoped, tag = 'scoped memory for tpu_custom_call.1']
    #allocation7 [shape = 'u8[8192]{0}', space=vmem, size = 0x2000, scoped, tag = 'input window, operand 4, single buffered']
    #allocation8 [shape = 'u8[8192]{0}', space=vmem, size = 0x2000, scoped, tag = 'output window, operand 0, single buffered']
    %10 = vsyncpa [#allocation3], 0
    %11 = vsyncpa [#allocation6], 0
    %12 = vsyncpa [#allocation4], 0
    // Predicated region
    $region2: #{tpu_custom_call.1} parent=1 // pred_check
      _
    $region3: #{tpu_custom_call.1} parent=1 // pred_check_branch
      %14 = sbr.rel (0) target = $region5
    $region4: #{tpu_custom_call.1} parent=1 // pred_region
      %s16 = ssub.s32 64, 64
      %17 = vsyncadd [#allocation3], %s16
      %s19 = sshll.u32 [#allocation2], 4
      %s20 = int_to_ptr.vmem [resolvable:$true] %s19
      %22 = dma.hbm_to_vmem [thread:$0]  %s0, 64, %s20, [#allocation3]
    $region5: #{tpu_custom_call.1} parent=1 // pred_fallthru
      _
    // Predicated region
    $region6: #{tpu_custom_call.1} parent=1 // pred_check
      _
    $region7: #{tpu_custom_call.1} parent=1 // pred_check_branch
      %24 = sbr.rel (0) target = $region9
    $region8: #{tpu_custom_call.1} parent=1 // pred_region
      %s26 = ssub.s32 64, 64
      %27 = vsyncadd [#allocation6], %s26
      %s29 = sshll.u32 [#allocation5], 4
      %s30 = int_to_ptr.vmem [resolvable:$true] %s29
      %32 = dma.hbm_to_vmem [thread:$0]  %s1, 64, %s30, [#allocation6]
    $region9: #{tpu_custom_call.1} parent=1 // pred_fallthru
      _
    // Predicated region
    $region10: #{tpu_custom_call.1} parent=1 // pred_check
      _
    $region11: #{tpu_custom_call.1} parent=1 // pred_check_branch
      %34 = sbr.rel (0) target = $region13
    $region12: #{tpu_custom_call.1} parent=1 // pred_region
      _
    $region13: #{tpu_custom_call.1} parent=1 // pred_fallthru
      _
    // Predicated region
    $region14: #{tpu_custom_call.1} parent=1 // pred_check
      _
    $region15: #{tpu_custom_call.1} parent=1 // pred_check_branch
      %36 = sbr.rel (0) target = $region17
    $region16: #{tpu_custom_call.1} parent=1 // pred_region
      _
    $region17: #{tpu_custom_call.1} parent=1 // pred_fallthru
      _
    // Predicated region
    $region18: #{tpu_custom_call.1} parent=1 // pred_check
      _
    $region19: #{tpu_custom_call.1} parent=1 // pred_check_branch
      %38 = sbr.rel (0) target = $region21
    $region20: #{tpu_custom_call.1} parent=1 // pred_region
      %s40 = ssub.s32 256, 256
      %41 = vsyncadd [#allocation6], %s40
      %s43 = sshll.u32 [#allocation7], 4
      %s44 = int_to_ptr.vmem [resolvable:$true] %s43
      %46 = dma.hbm_to_vmem [thread:$0]  %s4, 256, %s44, [#allocation6]
    $region21: #{tpu_custom_call.1} parent=1 // pred_fallthru
      _
    // Predicated region
    $region22: #{tpu_custom_call.1} parent=1 // pred_check
      _
    $region23: #{tpu_custom_call.1} parent=1 // pred_check_branch
      %48 = sbr.rel (0) target = $region25
    $region24: #{tpu_custom_call.1} parent=1 // pred_region
      %49 = dma.done [#allocation3], 64
    $region25: #{tpu_custom_call.1} parent=1 // pred_fallthru
      _
    // Predicated region
    $region26: #{tpu_custom_call.1} parent=1 // pred_check
      _
    $region27: #{tpu_custom_call.1} parent=1 // pred_check_branch
      %51 = sbr.rel (0) target = $region29
    $region28: #{tpu_custom_call.1} parent=1 // pred_region
      %52 = dma.done [#allocation6], 64
    $region29: #{tpu_custom_call.1} parent=1 // pred_fallthru
      _
    // Predicated region
    $region30: #{tpu_custom_call.1} parent=1 // pred_check
      _
    $region31: #{tpu_custom_call.1} parent=1 // pred_check_branch
      %54 = sbr.rel (0) target = $region33
    $region32: #{tpu_custom_call.1} parent=1 // pred_region
      %55 = dma.done [#allocation6], 256
    $region33: #{tpu_custom_call.1} parent=1 // pred_fallthru
      _
    %v56 = vld [vmem:[#allocation7] sm:$0xff]
    %v57 = vld [vmem:[#allocation7 + $0x8] sm:$0xff]
    %v58 = vld [vmem:[#allocation2] sm:$0xf]
    %v60 = vlaneseq
    %v61 = vshrl.u32 %v60, 7
    %v62 = vsub.s32 0, %v61
    %v63 = vrot.slane %v58, %v62
    %v64 = vlaneseq
    %v65 = vshrl.u32 %v64, 7
    %v66 = vsub.s32 1, %v65
    %v67 = vrot.slane %v58, %v66
    %v68 = vlaneseq
    %v69 = vshrl.u32 %v68, 7
    %v70 = vsub.s32 2, %v69
    %v71 = vrot.slane %v58, %v70
    %v72 = vlaneseq
    %v73 = vshrl.u32 %v72, 7
    %v74 = vsub.s32 3, %v73
    %v75 = vrot.slane %v58, %v74
    %v76 = vcombine.low %v63, %v67
    %v77 = vcombine.low %v71, %v75
    %v80 = vadd.f32 %v56, %v76
    %v81 = vadd.f32 %v57, %v77
    %v82 = vtanh.pop %v80
    %v83 = vtanh.pop %v81
    %v84 = vld [vmem:[#allocation5] sm:$0xf]
    %v86 = vlaneseq
    %v87 = vshrl.u32 %v86, 7
    %v88 = vsub.s32 0, %v87
    %v89 = vrot.slane %v84, %v88
    %v90 = vlaneseq
    %v91 = vshrl.u32 %v90, 7
    %v92 = vsub.s32 1, %v91
    %v93 = vrot.slane %v84, %v92
    %v94 = vlaneseq
    %v95 = vshrl.u32 %v94, 7
    %v96 = vsub.s32 2, %v95
    %v97 = vrot.slane %v84, %v96
    %v98 = vlaneseq
    %v99 = vshrl.u32 %v98, 7
    %v100 = vsub.s32 3, %v99
    %v101 = vrot.slane %v84, %v100
    %v102 = vcombine.low %v89, %v93
    %v103 = vcombine.low %v97, %v101
    %v106 = vmul.f32 %v82, %v102
    %v107 = vmul.f32 %v83, %v103
    %v108 = vld [vmem:[%s2] sm:$0xf]
    %v110 = vlaneseq
    %v111 = vshrl.u32 %v110, 7
    %v112 = vsub.s32 0, %v111
    %v113 = vrot.slane %v108, %v112
    %v114 = vlaneseq
    %v115 = vshrl.u32 %v114, 7
    %v116 = vsub.s32 1, %v115
    %v117 = vrot.slane %v108, %v116
    %v118 = vlaneseq
    %v119 = vshrl.u32 %v118, 7
    %v120 = vsub.s32 2, %v119
    %v121 = vrot.slane %v108, %v120
    %v122 = vlaneseq
    %v123 = vshrl.u32 %v122, 7
    %v124 = vsub.s32 3, %v123
    %v125 = vrot.slane %v108, %v124
    %v126 = vcombine.low %v113, %v117
    %v127 = vcombine.low %v121, %v125
    %v130 = vsub.f32 %v106, %v126
    %v131 = vsub.f32 %v107, %v127
    %v132 = vround.ne.pseudo %v130
    %v133 = vround.ne.pseudo %v131
    %v134 = vld [vmem:[%s3] sm:$0xf]
    %v136 = vlaneseq
    %v137 = vshrl.u32 %v136, 7
    %v138 = vsub.s32 0, %v137
    %v139 = vrot.slane %v134, %v138
    %v140 = vlaneseq
    %v141 = vshrl.u32 %v140, 7
    %v142 = vsub.s32 1, %v141
    %v143 = vrot.slane %v134, %v142
    %v144 = vlaneseq
    %v145 = vshrl.u32 %v144, 7
    %v146 = vsub.s32 2, %v145
    %v147 = vrot.slane %v134, %v146
    %v148 = vlaneseq
    %v149 = vshrl.u32 %v148, 7
    %v150 = vsub.s32 3, %v149
    %v151 = vrot.slane %v134, %v150
    %v152 = vcombine.low %v139, %v143
    %v153 = vcombine.low %v147, %v151
    %v156 = vmul.f32 %v132, %v152
    %v157 = vmul.f32 %v133, %v153
    %158 = vst [vmem:[#allocation8] sm:$0xff] %v156
    %159 = vst [vmem:[#allocation8 + $0x8] sm:$0xff] %v157
    // Predicated region
    $region34: #{tpu_custom_call.1} parent=1 // pred_check
      _
    $region35: #{tpu_custom_call.1} parent=1 // pred_check_branch
      %161 = sbr.rel (0) target = $region37
    $region36: #{tpu_custom_call.1} parent=1 // pred_region
      %s163 = ssub.s32 256, 256
      %164 = vsyncadd [#allocation4], %s163
      %s166 = sshll.u32 [#allocation8], 4
      %s167 = int_to_ptr.vmem [resolvable:$true] %s166
      %169 = dma.vmem_to_hbm [thread:$0]  %s167, 256, %s5, [#allocation4]
    $region37: #{tpu_custom_call.1} parent=1 // pred_fallthru
      _
    // Predicated region
    $region38: #{tpu_custom_call.1} parent=1 // pred_check
      _
    $region39: #{tpu_custom_call.1} parent=1 // pred_check_branch
      %171 = sbr.rel (0) target = $region41
    $region40: #{tpu_custom_call.1} parent=1 // pred_region
      %172 = dma.done [#allocation4], 256
    $region41: #{tpu_custom_call.1} parent=1 // pred_fallthru
      _
    %173 = vsyncpa [#allocation3], 1
    %174 = vsyncpa [#allocation6], 1
    %175 = vsyncpa [#allocation4], 1

</llo_original>
